<compile_context>
chip_gen: v7x
topology: tpu7x:2x2x1
jax: 0.10.0
libtpu: 0.0.40
codegen_flags: <defaults>
</compile_context>

<pallas_src>
import jax
import jax.numpy as jnp
from jax.experimental import pallas as pl
from jax.experimental.pallas import tpu as pltpu


def nest_mlp_kernel(x_ref, wt_ref, b_ref, o_ref):
    """One batch-row tile: y = relu(x @ wt + b)."""
    x = x_ref[...].astype(jnp.float32)        # (tm, Din)
    wt = wt_ref[...].astype(jnp.float32)      # (Din, Dout) == W^T
    b = b_ref[...].astype(jnp.float32)        # (1, Dout)

    h = jnp.dot(x, wt, preferred_element_type=jnp.float32) + b
    o_ref[...] = jnp.maximum(h, 0.0).astype(o_ref.dtype)


def nest_mlp(x, w, b, *, max_block_rows=256):
    """x: (N, 40) f32; w: (30, 40) PyTorch (out, in) layout; b: (30,)."""
    n, d_in = x.shape
    d_out = w.shape[0]

    wt = jnp.transpose(w)          # (in, out) so kernel does x @ wt
    b2 = b.reshape(1, d_out)       # keep 2-D for TPU layout

    # Row tile: whole batch if small, else 256-row tiles (multiple of 8 for f32).
    tm = n if n <= max_block_rows else max_block_rows
    grid = (pl.cdiv(n, tm),)

    return pl.pallas_call(
        nest_mlp_kernel,
        out_shape=jax.ShapeDtypeStruct((n, d_out), jnp.float32),
        grid=grid,
        in_specs=[
            pl.BlockSpec((tm, d_in), lambda i: (i, 0)),      # x: tiled over rows
            pl.BlockSpec((d_in, d_out), lambda i: (0, 0)),   # W^T: resident in VMEM
            pl.BlockSpec((1, d_out), lambda i: (0, 0)),      # bias: resident in VMEM
        ],
        out_specs=pl.BlockSpec((tm, d_out), lambda i: (i, 0)),
        compiler_params=pltpu.CompilerParams(
            dimension_semantics=("parallel",),
        ),
    )(x, wt, b2)


if __name__ == "__main__":
    key = jax.random.PRNGKey(0)
    k_x, k_w, k_b = jax.random.split(key, 3)

    N, D_IN, D_OUT = 2, 40, 30
    x = jax.random.normal(k_x, (N, D_IN), dtype=jnp.float32)

    # nn.Linear(40, 30): deterministic synthetic init (uniform like PyTorch's default range).
    bound = 1.0 / jnp.sqrt(jnp.float32(D_IN))
    w = jax.random.uniform(k_w, (D_OUT, D_IN), minval=-bound, maxval=bound, dtype=jnp.float32)
    b = jax.random.uniform(k_b, (D_OUT,), minval=-bound, maxval=bound, dtype=jnp.float32)

    result = nest_mlp(x, w, b)
    jax.block_until_ready(result)

    # Pure-JAX reference of the same semantics.
    def ref(x, w, b):
        return jnp.maximum(x @ w.T + b, 0.0)

    ref_val = ref(x, w, b)
    assert result.shape == (N, D_OUT), result.shape
    assert jnp.allclose(result, ref_val, rtol=1e-5, atol=1e-5), (result, ref_val)
    print("KERNEL_OK")
</pallas_src>

<mosaic_0001>
module attributes {stable_mosaic.version = 11 : i64} {
  func.func @nest_mlp_kernel(%arg0: i32, %arg1: memref<2x40xf32, #tpu.memory_space<vmem>>, %arg2: memref<40x30xf32, #tpu.memory_space<vmem>>, %arg3: memref<1x30xf32, #tpu.memory_space<vmem>>, %arg4: memref<2x30xf32, #tpu.memory_space<vmem>>) attributes {dimension_semantics = [#tpu.dimension_semantics<parallel>], iteration_bounds = array<i64: 1>, scalar_prefetch = 0 : i64, scratch_operands = 0 : i64, tpu.core_type = #tpu.core_type<tc>, window_params = [{transform_indices = @transform_0, window_bounds = array<i64: 2, 40>}, {pipeline_mode = #tpu.pipeline_mode<synchronous>, transform_indices = @transform_1, window_bounds = array<i64: 40, 30>}, {pipeline_mode = #tpu.pipeline_mode<synchronous>, transform_indices = @transform_2, window_bounds = array<i64: 1, 30>}, {transform_indices = @transform_3, window_bounds = array<i64: 2, 30>}]} {
    %c0 = arith.constant 0 : index
    %c0_0 = arith.constant 0 : index
    %0 = vector.load %arg1[%c0, %c0_0] : memref<2x40xf32, #tpu.memory_space<vmem>>, vector<2x40xf32>
    %c0_1 = arith.constant 0 : index
    %c0_2 = arith.constant 0 : index
    %1 = vector.load %arg2[%c0_1, %c0_2] : memref<40x30xf32, #tpu.memory_space<vmem>>, vector<40x30xf32>
    %c0_3 = arith.constant 0 : index
    %c0_4 = arith.constant 0 : index
    %2 = vector.load %arg3[%c0_3, %c0_4] : memref<1x30xf32, #tpu.memory_space<vmem>>, vector<1x30xf32>
    %cst = arith.constant dense<0.000000e+00> : vector<2x30xf32>
    %3 = tpu.matmul %0, %1, %cst {dimension_numbers = #tpu.dot_dimension_numbers<[1], [0], [0], [1], [0, 0, 1, 1], [], []>} : vector<2x40xf32>, vector<40x30xf32>, vector<2x30xf32> -> vector<2x30xf32>
    %4 = vector.broadcast %2 : vector<1x30xf32> to vector<2x30xf32>
    %5 = arith.addf %3, %4 : vector<2x30xf32>
    %cst_5 = arith.constant 0.000000e+00 : f32
    %6 = vector.broadcast %cst_5 : f32 to vector<2x30xf32>
    %7 = arith.maximumf %5, %6 : vector<2x30xf32>
    %c0_6 = arith.constant 0 : index
    %c0_7 = arith.constant 0 : index
    %8 = vector.load %arg4[%c0_6, %c0_7] : memref<2x30xf32, #tpu.memory_space<vmem>>, vector<2x30xf32>
    tpu.vector_store %arg4[%c0_6, %c0_7], %7 {strides = array<i32>} : memref<2x30xf32, #tpu.memory_space<vmem>>, vector<2x30xf32>,
    return
  }
  func.func @transform_0(%arg0: i32) -> (i32, i32) {
    %c0_i32 = arith.constant 0 : i32
    %c0_i32_0 = arith.constant 0 : i32
    return %arg0, %c0_i32 : i32, i32
  }
  func.func @transform_1(%arg0: i32) -> (i32, i32) {
    %c0_i32 = arith.constant 0 : i32
    %c0_i32_0 = arith.constant 0 : i32
    %c0_i32_1 = arith.constant 0 : i32
    return %c0_i32, %c0_i32_0 : i32, i32
  }
  func.func @transform_2(%arg0: i32) -> (i32, i32) {
    %c0_i32 = arith.constant 0 : i32
    %c0_i32_0 = arith.constant 0 : i32
    %c0_i32_1 = arith.constant 0 : i32
    return %c0_i32, %c0_i32_0 : i32, i32
  }
  func.func @transform_3(%arg0: i32) -> (i32, i32) {
    %c0_i32 = arith.constant 0 : i32
    %c0_i32_0 = arith.constant 0 : i32
    return %arg0, %c0_i32 : i32, i32
  }
}

</mosaic_0001>

<llo_original>
// kernel: tpu_custom_call.1
$region0: #{tpu_custom_call.1}
  #allocation0 [shape = 'u32[]', space=smem, size = 0x4, offset = 0x4, fixed_abs, tag = 'smem constant byte address 0x4 - core index']
  #allocation1 [shape = 'u32[144,128]{1,0:T(1,128)}', space=vmem, size = 0x12000, scoped, tag = 'internal scratch']
  %s0 = inlined_call_operand.vmem [shape: f32[2,40], index: 0, kind: input, shape index: {}]
  %s1 = inlined_call_operand.vmem [shape: f32[40,30], index: 1, kind: input, shape index: {}]
  %s2 = inlined_call_operand.vmem [shape: f32[1,30], index: 2, kind: input, shape index: {}]
  %s3 = inlined_call_operand.hbm [shape: f32[2,30], index: 3, kind: output, shape index: {}]
  %s4 = sld [smem:[#allocation0]]
  $region22: #{tpu_custom_call.1} parent=0
    _
  %s6 = ssub.s32 1, %s4
  %s7 = scalar_select 0, %s6, %s4
  $region1: #{tpu_custom_call.1} parent=0
    #allocation2 [shape = 'u8[1024]{0}', space=vmem, size = 0x400, scoped, tag = 'output window, operand 0, single buffered']
    #allocation3 [shape = 's32[1]{0}', space=sflag, size = 0x4, scoped, tag = 'scoped memory for tpu_custom_call.1']
    %8 = vsyncpa [#allocation3], 0
    // Predicated region
    $region2: #{tpu_custom_call.1} parent=1 // pred_check
      _
    $region3: #{tpu_custom_call.1} parent=1 // pred_check_branch
      %10 = sbr.rel (0) target = $region5
    $region4: #{tpu_custom_call.1} parent=1 // pred_region
      _
    $region5: #{tpu_custom_call.1} parent=1 // pred_fallthru
      _
    // Predicated region
    $region6: #{tpu_custom_call.1} parent=1 // pred_check
      _
    $region7: #{tpu_custom_call.1} parent=1 // pred_check_branch
      %12 = sbr.rel (0) target = $region9
    $region8: #{tpu_custom_call.1} parent=1 // pred_region
      _
    $region9: #{tpu_custom_call.1} parent=1 // pred_fallthru
      _
    // Predicated region
    $region10: #{tpu_custom_call.1} parent=1 // pred_check
      _
    $region11: #{tpu_custom_call.1} parent=1 // pred_check_branch
      %14 = sbr.rel (0) target = $region13
    $region12: #{tpu_custom_call.1} parent=1 // pred_region
      _
    $region13: #{tpu_custom_call.1} parent=1 // pred_fallthru
      _
    %v15 = vld [vmem:[%s0] sm:$0x3]
    %v16 = vld [vmem:[%s1] sm:$0xff]
    %v17 = vld [vmem:[%s1 + $0x8] sm:$0xff]
    %v18 = vld [vmem:[%s1 + $0x10] sm:$0xff]
    %v19 = vld [vmem:[%s1 + $0x18] sm:$0xff]
    %v20 = vld [vmem:[%s1 + $0x20] sm:$0xff]
    %v21 = vld [vmem:[%s2] sm:$0x1]
    %v23 = vlaneseq
    %v24 = vshrl.u32 %v23, 7
    %v25 = vsub.s32 0, %v24
    %v26 = vrot.slane %v21, %v25
    %vm28 = vcmask 326656
    %v30 = vsel %vm28, %v15, 0
    %32 = vmatprep.subr.mxu0 0.0
    %33 = vmatpush1.msra.mxu0 %v16
    %34 = vmatprep.subr.mxu0 0.0
    %35 = vmatpush1.msra.mxu0 %v17
    %36 = vmatprep.subr.mxu0 0.0
    %37 = vmatpush1.msra.mxu0 %v18
    %38 = vmatprep.subr.mxu0 0.0
    %39 = vmatpush1.msra.mxu0 %v19
    %40 = vmatprep.subr.mxu0 0.0
    %41 = vmatpush1.msra.mxu0 %v20
    %42 = vmatprep.subr.mxu0 0.0
    %43 = vmatpush1.msra.mxu0 0.0
    %44 = vmatprep.subr.mxu0 0.0
    %45 = vmatpush1.msra.mxu0 0.0
    %46 = vmatprep.subr.mxu0 0.0
    %47 = vmatpush1.msra.mxu0 0.0
    %48 = vmatprep.subr.mxu0 0.0
    %49 = vmatpush1.msra.mxu0 0.0
    %50 = vmatprep.subr.mxu0 0.0
    %51 = vmatpush1.msra.mxu0 0.0
    %52 = vmatprep.subr.mxu0 0.0
    %53 = vmatpush1.msra.mxu0 0.0
    %54 = vmatprep.subr.mxu0 0.0
    %55 = vmatpush1.msra.mxu0 0.0
    %56 = vmatprep.subr.mxu0 0.0
    %57 = vmatpush1.msra.mxu0 0.0
    %58 = vmatprep.subr.mxu0 0.0
    %59 = vmatpush1.msra.mxu0 0.0
    %60 = vmatprep.subr.mxu0 0.0
    %61 = vmatpush1.msra.mxu0 0.0
    %62 = vmatprep.subr.mxu0 0.0
    %63 = vmatpush1.msra.mxu0 0.0
    %64 = vmatprep.subr.mxu0 0.0
    %65 = vmatpush1.msra.mxu0 0.0
    %66 = vmatprep.subr.mxu0 0.0
    %67 = vmatpush1.msra.mxu0 0.0
    %68 = vmatprep.subr.mxu0 0.0
    %69 = vmatpush1.msra.mxu0 0.0
    %70 = vmatprep.subr.mxu0 0.0
    %71 = vmatpush1.msra.mxu0 0.0
    %72 = vmatprep.subr.mxu0 0.0
    %73 = vmatpush1.msra.mxu0 0.0
    %74 = vmatprep.subr.mxu0 0.0
    %75 = vmatpush1.msra.mxu0 0.0
    %76 = vmatprep.subr.mxu0 0.0
    %77 = vmatpush1.msra.mxu0 0.0
    %78 = vmatprep.subr.mxu0 0.0
    %79 = vmatpush1.msra.mxu0 0.0
    %80 = vmatprep.subr.mxu0 0.0
    %81 = vmatpush1.msra.mxu0 0.0
    %82 = vmatprep.subr.mxu0 0.0
    %83 = vmatpush1.msra.mxu0 0.0
    %84 = vmatprep.subr.mxu0 0.0
    %85 = vmatpush1.msra.mxu0 0.0
    %86 = vmatprep.subr.mxu0 0.0
    %87 = vmatpush1.msra.mxu0 0.0
    %88 = vmatprep.subr.mxu0 0.0
    %89 = vmatpush1.msra.mxu0 0.0
    %90 = vmatprep.subr.mxu0 0.0
    %91 = vmatpush1.msra.mxu0 0.0
    %92 = vmatprep.subr.mxu0 0.0
    %93 = vmatpush1.msra.mxu0 0.0
    %94 = vmatprep.subr.mxu0 0.0
    %95 = vmatpush1.msra.mxu0 0.0
    %96 = vmatprep.mubr.f32.mxu0 0.0
    %97 = vmatmul.mubr.f32.gmra.mrb[0].mxu0 %v30
    %v98 = vpop.f32.mrb[0].mxu0
    %v99 = vadd.f32 %v26, %v98
    %v100 = vpop.f32.mrb[0].mxu0
    %101 = vdwg.mxu0
    %v102 = vmax.f32 %v99, 0.0
    %vm103 = vcmask 238592
    %104 = vst.msk [vmem:[#allocation2] sm:$0x3] %vm103, %v102
    // Predicated region
    $region14: #{tpu_custom_call.1} parent=1 // pred_check
      _
    $region15: #{tpu_custom_call.1} parent=1 // pred_check_branch
      %106 = sbr.rel (0) target = $region17
    $region16: #{tpu_custom_call.1} parent=1 // pred_region
      %s108 = ssub.s32 32, 32
      %109 = vsyncadd [#allocation3], %s108
      %s111 = sshll.u32 [#allocation2], 4
      %s112 = int_to_ptr.vmem [resolvable:$true] %s111
      %114 = dma.vmem_to_hbm [thread:$0]  %s112, 32, %s3, [#allocation3]
    $region17: #{tpu_custom_call.1} parent=1 // pred_fallthru
      _
    // Predicated region
    $region18: #{tpu_custom_call.1} parent=1 // pred_check
      _
    $region19: #{tpu_custom_call.1} parent=1 // pred_check_branch
      %116 = sbr.rel (0) target = $region21
    $region20: #{tpu_custom_call.1} parent=1 // pred_region
      %117 = dma.done [#allocation3], 32
    $region21: #{tpu_custom_call.1} parent=1 // pred_fallthru
      _
    %118 = vsyncpa [#allocation3], 1

</llo_original>
